<compile_context>
chip_gen: v7x
topology: tpu7x:2x2x1
jax: 0.10.0
libtpu: 0.0.40
codegen_flags: <defaults>
</compile_context>

<pallas_src>
import functools
import math

import jax
import jax.numpy as jnp
from jax import lax
from jax.experimental import pallas as pl
from jax.experimental.pallas import tpu as pltpu

_INV_SQRT2 = 1.0 / math.sqrt(2.0)


def _round_up(x, m):
    return ((x + m - 1) // m) * m


def _choose_pack(c_in, c_out, lane=128):
    """Smallest tokens-per-row packing that makes input AND output rows lane-dense."""
    for p in (1, 2, 4, 8, 16):
        if (p * c_in) % lane == 0 and (p * c_out) % lane == 0:
            return p
    return 1  # fall back to unpacked; full-extent last dim is still a legal block


def _mlp_kernel(x_ref, w1_ref, b1_ref, w2_ref, b2_ref, o_ref, *, use_square_relu):
    # proj1 on packed rows with block-diagonal weights:
    #   [tile, P*C_in] @ [P*C_in, P*H] -> f32 accumulator on the MXU.
    h = jnp.dot(x_ref[...], w1_ref[...], preferred_element_type=jnp.float32)
    h = h + b1_ref[...]                                   # f32 bias, [1, P*H]
    if use_square_relu:
        h = jnp.maximum(h, 0.0)
        h = h * h
    else:
        # Exact erf GELU (matches PyTorch nn.GELU(approximate='none')); f32 on VPU.
        h = 0.5 * h * (1.0 + lax.erf(h * _INV_SQRT2))
    h = h.astype(w2_ref.dtype)                            # downcast only at MXU input
    # proj2: [tile, P*H] @ [P*H, P*C_out] -> f32 accumulator.
    y = jnp.dot(h, w2_ref[...], preferred_element_type=jnp.float32)
    y = y + b2_ref[...]                                   # f32 bias, [1, P*C_out]
    # dropout_prob = 0.0 -> identity.
    o_ref[...] = y.astype(o_ref.dtype)


def mlp_pallas(x, w1, b1, w2, b2, *, tile_rows=2048, compute_dtype=None,
               out_dtype=None, use_square_relu=False):
    """x: [B, S, C_in]; w1: [C_in, H]; b1: [H]; w2: [H, C_out]; b2: [C_out].

    tile_rows:     packed-row tile (each packed row = `pack` tokens). 2048 fits the
                   v5e 16 MiB scoped-VMEM default; push to 4096-8192 on v6e/v7x.
    compute_dtype: e.g. jnp.bfloat16 -> x/w1/w2 cast at the boundary (halves HBM
                   input traffic); accumulation + activation stay in f32.
    out_dtype:     output dtype; defaults to compute_dtype if given, else x.dtype
                   (so the bf16 path also writes bf16 and cuts output traffic).
    """
    B, S, C_in = x.shape
    H = w1.shape[1]
    C_out = w2.shape[1]
    T = B * S

    if out_dtype is None:
        out_dtype = compute_dtype if compute_dtype is not None else x.dtype

    pack = _choose_pack(C_in, C_out)

    x2d = x.reshape(T, C_in)
    if compute_dtype is not None:
        x2d = x2d.astype(compute_dtype)
        w1 = w1.astype(compute_dtype)
        w2 = w2.astype(compute_dtype)

    # Pack `pack` tokens per lane-dense row (free contiguous reshape). Only a
    # tiny (<= pack-1 row) pad when T is not a multiple of `pack`.
    T_pack = _round_up(T, pack)
    if T_pack != T:
        x2d = jnp.pad(x2d, ((0, T_pack - T), (0, 0)))
    Tp = T_pack // pack
    xp = x2d.reshape(Tp, pack * C_in)

    # Block-diagonal weights / tiled biases, built once per call (< 1 MiB total);
    # constant block index keeps them resident in VMEM across grid steps.
    w1p = jnp.kron(jnp.eye(pack, dtype=w1.dtype), w1)        # [P*C_in, P*H]
    w2p = jnp.kron(jnp.eye(pack, dtype=w2.dtype), w2)        # [P*H,  P*C_out]
    b1p = jnp.tile(b1.astype(jnp.float32), pack).reshape(1, pack * H)
    b2p = jnp.tile(b2.astype(jnp.float32), pack).reshape(1, pack * C_out)

    # Row tile: single full-extent block for small inputs, otherwise a large
    # multiple-of-8 tile; the ragged last block is handled by Pallas (masked
    # writes), so no jnp.pad / output-slice copies on the streamed axis.
    if Tp <= tile_rows:
        tile = Tp
    else:
        tile = _round_up(tile_rows, 8)
    grid = (pl.cdiv(Tp, tile),)

    in_bytes = jnp.dtype(xp.dtype).itemsize
    out_bytes = jnp.dtype(out_dtype).itemsize
    cost = pl.CostEstimate(
        flops=2 * Tp * (pack * C_in) * (pack * H) + 2 * Tp * (pack * H) * (pack * C_out),
        transcendentals=0 if use_square_relu else Tp * pack * H,
        bytes_accessed=(xp.size * in_bytes + w1p.size * in_bytes + w2p.size * in_bytes
                        + b1p.size * 4 + b2p.size * 4
                        + Tp * pack * C_out * out_bytes),
    )

    kernel = functools.partial(_mlp_kernel, use_square_relu=use_square_relu)

    outp = pl.pallas_call(
        kernel,
        out_shape=jax.ShapeDtypeStruct((Tp, pack * C_out), out_dtype),
        grid=grid,
        in_specs=[
            # x: streamed over packed rows (lane-dense: P*C_in = multiple of 128)
            pl.BlockSpec((tile, pack * C_in), lambda i: (i, 0)),
            # weights / biases: constant block index -> VMEM-resident, no re-DMA
            pl.BlockSpec((pack * C_in, pack * H), lambda i: (0, 0)),
            pl.BlockSpec((1, pack * H), lambda i: (0, 0)),
            pl.BlockSpec((pack * H, pack * C_out), lambda i: (0, 0)),
            pl.BlockSpec((1, pack * C_out), lambda i: (0, 0)),
        ],
        out_specs=pl.BlockSpec((tile, pack * C_out), lambda i: (i, 0)),
        compiler_params=pltpu.CompilerParams(
            dimension_semantics=("parallel",),   # 2 TCs on v7x; no-op on v5e/v6e
            vmem_limit_bytes=48 << 20,           # headroom for larger tiles; < v7x physical
        ),
        cost_estimate=cost,
    )(xp, w1p, b1p, w2p, b2p)

    out2d = outp.reshape(T_pack, C_out)
    if T_pack != T:
        out2d = out2d[:T]
    return out2d.reshape(B, S, C_out)
    # TODO(synk): dropout with p > 0 in train mode (RNG masking) is not implemented;
    # module default p=0.0 (and eval-mode dropout) is the identity, as here.


def _torch_linear_init(key, fan_in, fan_out):
    """nn.Linear default init (uniform +-1/sqrt(fan_in)); weight in [fan_in, fan_out]."""
    kw, kb = jax.random.split(key)
    bound = 1.0 / math.sqrt(fan_in)
    w = jax.random.uniform(kw, (fan_in, fan_out), jnp.float32, -bound, bound)
    b = jax.random.uniform(kb, (fan_out,), jnp.float32, -bound, bound)
    return w, b


def _mlp_ref(x, w1, b1, w2, b2, use_square_relu=False):
    B, S, C_in = x.shape
    h = x.reshape(-1, C_in) @ w1 + b1
    if use_square_relu:
        h = jnp.maximum(h, 0.0) ** 2
    else:
        h = 0.5 * h * (1.0 + lax.erf(h * _INV_SQRT2))
    return (h @ w2 + b2).reshape(B, S, w2.shape[1])


if __name__ == "__main__":
    # Module config: MLP(in_channels=32, out_channels=32, widening_factor=4,
    #                    dropout_prob=0.0, use_square_relu=False)
    in_channels = 32
    out_channels = 32
    widening_factor = 4
    hidden = out_channels * widening_factor  # 128

    batch, seq = 2, 8

    key = jax.random.PRNGKey(0)
    kx, k1, k2 = jax.random.split(key, 3)

    x = jax.random.normal(kx, (batch, seq, in_channels), jnp.float32)
    w1, b1 = _torch_linear_init(k1, in_channels, hidden)
    w2, b2 = _torch_linear_init(k2, hidden, out_channels)

    # f32 path (matches reference)
    y_ref = _mlp_ref(x, w1, b1, w2, b2)
    y = mlp_pallas(x, w1, b1, w2, b2)
    jax.block_until_ready(y)
    assert jnp.allclose(y, y_ref, atol=1e-5, rtol=1e-5), "f32 mismatch vs reference"

    # bf16 data path (half input HBM traffic, bf16 output; f32 accumulation + GELU)
    y_bf16 = mlp_pallas(x, w1, b1, w2, b2, compute_dtype=jnp.bfloat16)
    jax.block_until_ready(y_bf16)
    assert jnp.allclose(y_bf16.astype(jnp.float32), y_ref, atol=1e-1, rtol=1e-1), \
        "bf16 path diverged"

    # ReLU^2 variant of the module
    y_sq = mlp_pallas(x, w1, b1, w2, b2, use_square_relu=True)
    y_sq_ref = _mlp_ref(x, w1, b1, w2, b2, use_square_relu=True)
    jax.block_until_ready(y_sq)
    assert jnp.allclose(y_sq, y_sq_ref, atol=1e-5, rtol=1e-5), "square-relu mismatch"

    # Ragged cases: T not a multiple of the 4-token packing, and a multi-step
    # grid with a partial last block (tile_rows forced tiny).
    x_odd = jax.random.normal(kx, (3, 5, in_channels), jnp.float32)       # T = 15
    y_odd = mlp_pallas(x_odd, w1, b1, w2, b2)
    jax.block_until_ready(y_odd)
    assert jnp.allclose(y_odd, _mlp_ref(x_odd, w1, b1, w2, b2), atol=1e-5, rtol=1e-5)

    x_rag = jax.random.normal(kx, (2, 40, in_channels), jnp.float32)      # Tp = 20
    y_rag = mlp_pallas(x_rag, w1, b1, w2, b2, tile_rows=8)                # grid=3, ragged
    jax.block_until_ready(y_rag)
    assert jnp.allclose(y_rag, _mlp_ref(x_rag, w1, b1, w2, b2), atol=1e-5, rtol=1e-5)

    print("KERNEL_OK")
</pallas_src>

<mosaic_0001>
module attributes {stable_mosaic.version = 11 : i64} {
  func.func @_mlp_kernel(%arg0: i32, %arg1: memref<4x128xf32, #tpu.memory_space<vmem>>, %arg2: memref<128x512xf32, #tpu.memory_space<vmem>>, %arg3: memref<1x512xf32, #tpu.memory_space<vmem>>, %arg4: memref<512x128xf32, #tpu.memory_space<vmem>>, %arg5: memref<1x128xf32, #tpu.memory_space<vmem>>, %arg6: memref<4x128xf32, #tpu.memory_space<vmem>>) attributes {dimension_semantics = [#tpu.dimension_semantics<parallel>], iteration_bounds = array<i64: 1>, scalar_prefetch = 0 : i64, scratch_operands = 0 : i64, tpu.core_type = #tpu.core_type<tc>, window_params = [{transform_indices = @transform_0, window_bounds = array<i64: 4, 128>}, {pipeline_mode = #tpu.pipeline_mode<synchronous>, transform_indices = @transform_1, window_bounds = array<i64: 128, 512>}, {pipeline_mode = #tpu.pipeline_mode<synchronous>, transform_indices = @transform_2, window_bounds = array<i64: 1, 512>}, {pipeline_mode = #tpu.pipeline_mode<synchronous>, transform_indices = @transform_3, window_bounds = array<i64: 512, 128>}, {pipeline_mode = #tpu.pipeline_mode<synchronous>, transform_indices = @transform_4, window_bounds = array<i64: 1, 128>}, {transform_indices = @transform_5, window_bounds = array<i64: 4, 128>}]} {
    %c0 = arith.constant 0 : index
    %c0_0 = arith.constant 0 : index
    %0 = vector.load %arg1[%c0, %c0_0] : memref<4x128xf32, #tpu.memory_space<vmem>>, vector<4x128xf32>
    %c0_1 = arith.constant 0 : index
    %c0_2 = arith.constant 0 : index
    %1 = vector.load %arg2[%c0_1, %c0_2] : memref<128x512xf32, #tpu.memory_space<vmem>>, vector<128x512xf32>
    %cst = arith.constant dense<0.000000e+00> : vector<4x512xf32>
    %2 = tpu.matmul %0, %1, %cst {dimension_numbers = #tpu.dot_dimension_numbers<[1], [0], [0], [1], [0, 0, 1, 1], [], []>} : vector<4x128xf32>, vector<128x512xf32>, vector<4x512xf32> -> vector<4x512xf32>
    %c0_3 = arith.constant 0 : index
    %c0_4 = arith.constant 0 : index
    %3 = vector.load %arg3[%c0_3, %c0_4] : memref<1x512xf32, #tpu.memory_space<vmem>>, vector<1x512xf32>
    %4 = vector.broadcast %3 : vector<1x512xf32> to vector<4x512xf32>
    %5 = arith.addf %2, %4 : vector<4x512xf32>
    %cst_5 = arith.constant 5.000000e-01 : f32
    %6 = vector.broadcast %cst_5 : f32 to vector<4x512xf32>
    %7 = arith.mulf %6, %5 : vector<4x512xf32>
    %cst_6 = arith.constant 0.707106769 : f32
    %8 = vector.broadcast %cst_6 : f32 to vector<4x512xf32>
    %9 = arith.mulf %5, %8 : vector<4x512xf32>
    %10 = math.erf %9 : vector<4x512xf32>
    %cst_7 = arith.constant 1.000000e+00 : f32
    %11 = vector.broadcast %cst_7 : f32 to vector<4x512xf32>
    %12 = arith.addf %11, %10 : vector<4x512xf32>
    %13 = arith.mulf %7, %12 : vector<4x512xf32>
    %c0_8 = arith.constant 0 : index
    %c0_9 = arith.constant 0 : index
    %14 = vector.load %arg4[%c0_8, %c0_9] : memref<512x128xf32, #tpu.memory_space<vmem>>, vector<512x128xf32>
    %cst_10 = arith.constant dense<0.000000e+00> : vector<4x128xf32>
    %15 = tpu.matmul %13, %14, %cst_10 {dimension_numbers = #tpu.dot_dimension_numbers<[1], [0], [0], [1], [0, 0, 1, 1], [], []>} : vector<4x512xf32>, vector<512x128xf32>, vector<4x128xf32> -> vector<4x128xf32>
    %c0_11 = arith.constant 0 : index
    %c0_12 = arith.constant 0 : index
    %16 = vector.load %arg5[%c0_11, %c0_12] : memref<1x128xf32, #tpu.memory_space<vmem>>, vector<1x128xf32>
    %17 = vector.broadcast %16 : vector<1x128xf32> to vector<4x128xf32>
    %18 = arith.addf %15, %17 : vector<4x128xf32>
    %c0_13 = arith.constant 0 : index
    %c0_14 = arith.constant 0 : index
    %19 = vector.load %arg6[%c0_13, %c0_14] : memref<4x128xf32, #tpu.memory_space<vmem>>, vector<4x128xf32>
    tpu.vector_store %arg6[%c0_13, %c0_14], %18 {strides = array<i32>} : memref<4x128xf32, #tpu.memory_space<vmem>>, vector<4x128xf32>,
    return
  }
  func.func @transform_0(%arg0: i32) -> (i32, i32) {
    %c0_i32 = arith.constant 0 : i32
    %c0_i32_0 = arith.constant 0 : i32
    return %arg0, %c0_i32 : i32, i32
  }
  func.func @transform_1(%arg0: i32) -> (i32, i32) {
    %c0_i32 = arith.constant 0 : i32
    %c0_i32_0 = arith.constant 0 : i32
    %c0_i32_1 = arith.constant 0 : i32
    return %c0_i32, %c0_i32_0 : i32, i32
  }
  func.func @transform_2(%arg0: i32) -> (i32, i32) {
    %c0_i32 = arith.constant 0 : i32
    %c0_i32_0 = arith.constant 0 : i32
    %c0_i32_1 = arith.constant 0 : i32
    return %c0_i32, %c0_i32_0 : i32, i32
  }
  func.func @transform_3(%arg0: i32) -> (i32, i32) {
    %c0_i32 = arith.constant 0 : i32
    %c0_i32_0 = arith.constant 0 : i32
    %c0_i32_1 = arith.constant 0 : i32
    return %c0_i32, %c0_i32_0 : i32, i32
  }
  func.func @transform_4(%arg0: i32) -> (i32, i32) {
    %c0_i32 = arith.constant 0 : i32
    %c0_i32_0 = arith.constant 0 : i32
    %c0_i32_1 = arith.constant 0 : i32
    return %c0_i32, %c0_i32_0 : i32, i32
  }
  func.func @transform_5(%arg0: i32) -> (i32, i32) {
    %c0_i32 = arith.constant 0 : i32
    %c0_i32_0 = arith.constant 0 : i32
    return %arg0, %c0_i32 : i32, i32
  }
}

</mosaic_0001>

<llo_original>
// kernel: tpu_custom_call.1
$region0: #{tpu_custom_call.1}
  #allocation0 [shape = 'u32[]', space=smem, size = 0x4, offset = 0x4, fixed_abs, tag = 'smem constant byte address 0x4 - core index']
  #allocation1 [shape = 'u32[144,128]{1,0:T(1,128)}', space=vmem, size = 0x12000, scoped, tag = 'internal scratch']
  %s0 = inlined_call_operand.hbm [shape: f32[4,128], index: 0, kind: input, shape index: {}]
  %s1 = inlined_call_operand.hbm [shape: f32[128,512], index: 1, kind: input, shape index: {}]
  %s2 = inlined_call_operand.vmem [shape: f32[1,512], index: 2, kind: input, shape index: {}]
  %s3 = inlined_call_operand.hbm [shape: f32[512,128], index: 3, kind: input, shape index: {}]
  %s4 = inlined_call_operand.vmem [shape: f32[1,128], index: 4, kind: input, shape index: {}]
  %s5 = inlined_call_operand.hbm [shape: f32[4,128], index: 5, kind: output, shape index: {}]
  %s6 = sld [smem:[#allocation0]]
  $region42: #{tpu_custom_call.1} parent=0
    _
  %s8 = ssub.s32 1, %s6
  %s9 = scalar_select 0, %s8, %s6
  $region1: #{tpu_custom_call.1} parent=0
    #allocation2 [shape = 'u8[2048]{0}', space=vmem, size = 0x800, scoped, tag = 'input window, operand 0, single buffered']
    #allocation3 [shape = 's32[1]{0}', space=sflag, size = 0x4, scoped, tag = 'scoped memory for tpu_custom_call.1']
    #allocation4 [shape = 's32[1]{0}', space=sflag, size = 0x4, scoped, tag = 'scoped memory for tpu_custom_call.1']
    #allocation5 [shape = 'u8[262144]{0}', space=vmem, size = 0x40000, scoped, tag = 'input window, operand 1, single buffered']
    #allocation6 [shape = 's32[1]{0}', space=sflag, size = 0x4, scoped, tag = 'scoped memory for tpu_custom_call.1']
    #allocation7 [shape = 'u8[262144]{0}', space=vmem, size = 0x40000, scoped, tag = 'input window, operand 3, single buffered']
    #allocation8 [shape = 'u8[2048]{0}', space=vmem, size = 0x800, scoped, tag = 'output window, operand 0, single buffered']
    %10 = vsyncpa [#allocation3], 0
    %11 = vsyncpa [#allocation6], 0
    %12 = vsyncpa [#allocation4], 0
    // Predicated region
    $region2: #{tpu_custom_call.1} parent=1 // pred_check
      _
    $region3: #{tpu_custom_call.1} parent=1 // pred_check_branch
      %14 = sbr.rel (0) target = $region5
    $region4: #{tpu_custom_call.1} parent=1 // pred_region
      %s16 = ssub.s32 64, 64
      %17 = vsyncadd [#allocation3], %s16
      %s19 = sshll.u32 [#allocation2], 4
      %s20 = int_to_ptr.vmem [resolvable:$true] %s19
      %22 = dma.hbm_to_vmem [thread:$0]  %s0, 64, %s20, [#allocation3]
    $region5: #{tpu_custom_call.1} parent=1 // pred_fallthru
      _
    // Predicated region
    $region6: #{tpu_custom_call.1} parent=1 // pred_check
      _
    $region7: #{tpu_custom_call.1} parent=1 // pred_check_branch
      %24 = sbr.rel (0) target = $region9
    $region8: #{tpu_custom_call.1} parent=1 // pred_region
      %s26 = ssub.s32 8192, 8192
      %27 = vsyncadd [#allocation6], %s26
      %s28 = sshll.u32 [#allocation5], 4
      %s29 = int_to_ptr.vmem [resolvable:$true] %s28
      %34 = dma.hbm_to_vmem [thread:$0]  %s1, 8192, %s29, [#allocation6], 512, 512, 32
    $region9: #{tpu_custom_call.1} parent=1 // pred_fallthru
      _
    // Predicated region
    $region10: #{tpu_custom_call.1} parent=1 // pred_check
      _
    $region11: #{tpu_custom_call.1} parent=1 // pred_check_branch
      %36 = sbr.rel (0) target = $region13
    $region12: #{tpu_custom_call.1} parent=1 // pred_region
      _
    $region13: #{tpu_custom_call.1} parent=1 // pred_fallthru
      _
    // Predicated region
    $region14: #{tpu_custom_call.1} parent=1 // pred_check
      _
    $region15: #{tpu_custom_call.1} parent=1 // pred_check_branch
      %38 = sbr.rel (0) target = $region17
    $region16: #{tpu_custom_call.1} parent=1 // pred_region
      %s40 = ssub.s32 8192, 8192
      %41 = vsyncadd [#allocation6], %s40
      %s42 = sshll.u32 [#allocation7], 4
      %s43 = int_to_ptr.vmem [resolvable:$true] %s42
      %48 = dma.hbm_to_vmem [thread:$0]  %s3, 8192, %s43, [#allocation6], 128, 128, 8
    $region17: #{tpu_custom_call.1} parent=1 // pred_fallthru
      _
    // Predicated region
    $region18: #{tpu_custom_call.1} parent=1 // pred_check
      _
    $region19: #{tpu_custom_call.1} parent=1 // pred_check_branch
      %50 = sbr.rel (0) target = $region21
    $region20: #{tpu_custom_call.1} parent=1 // pred_region
      _
    $region21: #{tpu_custom_call.1} parent=1 // pred_fallthru
      _
    // Predicated region
    $region22: #{tpu_custom_call.1} parent=1 // pred_check
      _
    $region23: #{tpu_custom_call.1} parent=1 // pred_check_branch
      %52 = sbr.rel (0) target = $region25
    $region24: #{tpu_custom_call.1} parent=1 // pred_region
      %53 = dma.done [#allocation3], 64
    $region25: #{tpu_custom_call.1} parent=1 // pred_fallthru
      _
    // Predicated region
    $region26: #{tpu_custom_call.1} parent=1 // pred_check
      _
    $region27: #{tpu_custom_call.1} parent=1 // pred_check_branch
      %55 = sbr.rel (0) target = $region29
    $region28: #{tpu_custom_call.1} parent=1 // pred_region
      %56 = dma.done [#allocation6], 8192
    $region29: #{tpu_custom_call.1} parent=1 // pred_fallthru
      _
    // Predicated region
    $region30: #{tpu_custom_call.1} parent=1 // pred_check
      _
    $region31: #{tpu_custom_call.1} parent=1 // pred_check_branch
      %58 = sbr.rel (0) target = $region33
    $region32: #{tpu_custom_call.1} parent=1 // pred_region
      %59 = dma.done [#allocation6], 8192
    $region33: #{tpu_custom_call.1} parent=1 // pred_fallthru
      _
    %v60 = vld [vmem:[#allocation2] sm:$0xf]
    %v61 = vld [vmem:[#allocation5] sm:$0xff]
    %v62 = vld [vmem:[#allocation5 + $0x8] sm:$0xff]
    %v63 = vld [vmem:[#allocation5 + $0x10] sm:$0xff]
    %v64 = vld [vmem:[#allocation5 + $0x18] sm:$0xff]
    %v65 = vld [vmem:[#allocation5 + $0x20] sm:$0xff]
    %v66 = vld [vmem:[#allocation5 + $0x28] sm:$0xff]
    %v67 = vld [vmem:[#allocation5 + $0x30] sm:$0xff]
    %v68 = vld [vmem:[#allocation5 + $0x38] sm:$0xff]
    %v69 = vld [vmem:[#allocation5 + $0x40] sm:$0xff]
    %v70 = vld [vmem:[#allocation5 + $0x48] sm:$0xff]
    %v71 = vld [vmem:[#allocation5 + $0x50] sm:$0xff]
    %v72 = vld [vmem:[#allocation5 + $0x58] sm:$0xff]
    %v73 = vld [vmem:[#allocation5 + $0x60] sm:$0xff]
    %v74 = vld [vmem:[#allocation5 + $0x68] sm:$0xff]
    %v75 = vld [vmem:[#allocation5 + $0x70] sm:$0xff]
    %v76 = vld [vmem:[#allocation5 + $0x78] sm:$0xff]
    %v77 = vld [vmem:[#allocation5 + $0x80] sm:$0xff]
    %v78 = vld [vmem:[#allocation5 + $0x88] sm:$0xff]
    %v79 = vld [vmem:[#allocation5 + $0x90] sm:$0xff]
    %v80 = vld [vmem:[#allocation5 + $0x98] sm:$0xff]
    %v81 = vld [vmem:[#allocation5 + $0xa0] sm:$0xff]
    %v82 = vld [vmem:[#allocation5 + $0xa8] sm:$0xff]
    %v83 = vld [vmem:[#allocation5 + $0xb0] sm:$0xff]
    %v84 = vld [vmem:[#allocation5 + $0xb8] sm:$0xff]
    %v85 = vld [vmem:[#allocation5 + $0xc0] sm:$0xff]
    %v86 = vld [vmem:[#allocation5 + $0xc8] sm:$0xff]
    %v87 = vld [vmem:[#allocation5 + $0xd0] sm:$0xff]
    %v88 = vld [vmem:[#allocation5 + $0xd8] sm:$0xff]
    %v89 = vld [vmem:[#allocation5 + $0xe0] sm:$0xff]
    %v90 = vld [vmem:[#allocation5 + $0xe8] sm:$0xff]
    %v91 = vld [vmem:[#allocation5 + $0xf0] sm:$0xff]
    %v92 = vld [vmem:[#allocation5 + $0xf8] sm:$0xff]
    %v93 = vld [vmem:[#allocation5 + $0x100] sm:$0xff]
    %v94 = vld [vmem:[#allocation5 + $0x108] sm:$0xff]
    %v95 = vld [vmem:[#allocation5 + $0x110] sm:$0xff]
    %v96 = vld [vmem:[#allocation5 + $0x118] sm:$0xff]
    %v97 = vld [vmem:[#allocation5 + $0x120] sm:$0xff]
    %v98 = vld [vmem:[#allocation5 + $0x128] sm:$0xff]
    %v99 = vld [vmem:[#allocation5 + $0x130] sm:$0xff]
    %v100 = vld [vmem:[#allocation5 + $0x138] sm:$0xff]
    %v101 = vld [vmem:[#allocation5 + $0x140] sm:$0xff]
    %v102 = vld [vmem:[#allocation5 + $0x148] sm:$0xff]
    %v103 = vld [vmem:[#allocation5 + $0x150] sm:$0xff]
    %v104 = vld [vmem:[#allocation5 + $0x158] sm:$0xff]
    %v105 = vld [vmem:[#allocation5 + $0x160] sm:$0xff]
    %v106 = vld [vmem:[#allocation5 + $0x168] sm:$0xff]
    %v107 = vld [vmem:[#allocation5 + $0x170] sm:$0xff]
    %v108 = vld [vmem:[#allocation5 + $0x178] sm:$0xff]
    %v109 = vld [vmem:[#allocation5 + $0x180] sm:$0xff]
    %v110 = vld [vmem:[#allocation5 + $0x188] sm:$0xff]
    %v111 = vld [vmem:[#allocation5 + $0x190] sm:$0xff]
    %v112 = vld [vmem:[#allocation5 + $0x198] sm:$0xff]
    %v113 = vld [vmem:[#allocation5 + $0x1a0] sm:$0xff]
    %v114 = vld [vmem:[#allocation5 + $0x1a8] sm:$0xff]
    %v115 = vld [vmem:[#allocation5 + $0x1b0] sm:$0xff]
    %v116 = vld [vmem:[#allocation5 + $0x1b8] sm:$0xff]
    %v117 = vld [vmem:[#allocation5 + $0x1c0] sm:$0xff]
    %v118 = vld [vmem:[#allocation5 + $0x1c8] sm:$0xff]
    %v119 = vld [vmem:[#allocation5 + $0x1d0] sm:$0xff]
    %v120 = vld [vmem:[#allocation5 + $0x1d8] sm:$0xff]
    %v121 = vld [vmem:[#allocation5 + $0x1e0] sm:$0xff]
    %v122 = vld [vmem:[#allocation5 + $0x1e8] sm:$0xff]
    %v123 = vld [vmem:[#allocation5 + $0x1f0] sm:$0xff]
    %v124 = vld [vmem:[#allocation5 + $0x1f8] sm:$0xff]
    %v125 = vld [vmem:[%s2] sm:$0xf]
    %v127 = vlaneseq
    %v128 = vshrl.u32 %v127, 7
    %v129 = vsub.s32 0, %v128
    %v130 = vrot.slane %v125, %v129
    %v131 = vlaneseq
    %v132 = vshrl.u32 %v131, 7
    %v133 = vsub.s32 1, %v132
    %v134 = vrot.slane %v125, %v133
    %v135 = vlaneseq
    %v136 = vshrl.u32 %v135, 7
    %v137 = vsub.s32 2, %v136
    %v138 = vrot.slane %v125, %v137
    %v139 = vlaneseq
    %v140 = vshrl.u32 %v139, 7
    %v141 = vsub.s32 3, %v140
    %v142 = vrot.slane %v125, %v141
    %147 = vmatprep.subr.mxu0 %v62
    %148 = vmatpush1.msra.mxu0 %v61
    %149 = vmatprep.subr.mxu0 %v66
    %150 = vmatpush1.msra.mxu0 %v65
    %151 = vmatprep.subr.mxu0 %v70
    %152 = vmatpush1.msra.mxu0 %v69
    %153 = vmatprep.subr.mxu0 %v74
    %154 = vmatpush1.msra.mxu0 %v73
    %155 = vmatprep.subr.mxu0 %v78
    %156 = vmatpush1.msra.mxu0 %v77
    %157 = vmatprep.subr.mxu0 %v82
    %158 = vmatpush1.msra.mxu0 %v81
    %159 = vmatprep.subr.mxu0 %v86
    %160 = vmatpush1.msra.mxu0 %v85
    %161 = vmatprep.subr.mxu0 %v90
    %162 = vmatpush1.msra.mxu0 %v89
    %163 = vmatprep.subr.mxu0 %v94
    %164 = vmatpush1.msra.mxu0 %v93
    %165 = vmatprep.subr.mxu0 %v98
    %166 = vmatpush1.msra.mxu0 %v97
    %167 = vmatprep.subr.mxu0 %v102
    %168 = vmatpush1.msra.mxu0 %v101
    %169 = vmatprep.subr.mxu0 %v106
    %170 = vmatpush1.msra.mxu0 %v105
    %171 = vmatprep.subr.mxu0 %v110
    %172 = vmatpush1.msra.mxu0 %v109
    %173 = vmatprep.subr.mxu0 %v114
    %174 = vmatpush1.msra.mxu0 %v113
    %175 = vmatprep.subr.mxu0 %v118
    %176 = vmatpush1.msra.mxu0 %v117
    %177 = vmatprep.subr.mxu0 %v122
    %178 = vmatpush1.msra.mxu0 %v121
    %179 = vmatprep.subr.mxu0 0.0
    %180 = vmatpush1.msra.mxu0 0.0
    %181 = vmatprep.subr.mxu0 0.0
    %182 = vmatpush1.msra.mxu0 0.0
    %183 = vmatprep.subr.mxu0 0.0
    %184 = vmatpush1.msra.mxu0 0.0
    %185 = vmatprep.subr.mxu0 0.0
    %186 = vmatpush1.msra.mxu0 0.0
    %187 = vmatprep.subr.mxu0 0.0
    %188 = vmatpush1.msra.mxu0 0.0
    %189 = vmatprep.subr.mxu0 0.0
    %190 = vmatpush1.msra.mxu0 0.0
    %191 = vmatprep.subr.mxu0 0.0
    %192 = vmatpush1.msra.mxu0 0.0
    %193 = vmatprep.subr.mxu0 0.0
    %194 = vmatpush1.msra.mxu0 0.0
    %195 = vmatprep.subr.mxu0 0.0
    %196 = vmatpush1.msra.mxu0 0.0
    %197 = vmatprep.subr.mxu0 0.0
    %198 = vmatpush1.msra.mxu0 0.0
    %199 = vmatprep.subr.mxu0 0.0
    %200 = vmatpush1.msra.mxu0 0.0
    %201 = vmatprep.subr.mxu0 0.0
    %202 = vmatpush1.msra.mxu0 0.0
    %203 = vmatprep.subr.mxu0 0.0
    %204 = vmatpush1.msra.mxu0 0.0
    %205 = vmatprep.subr.mxu0 0.0
    %206 = vmatpush1.msra.mxu0 0.0
    %207 = vmatprep.subr.mxu0 0.0
    %208 = vmatpush1.msra.mxu0 0.0
    %209 = vmatprep.subr.mxu0 0.0
    %210 = vmatpush1.msra.mxu0 0.0
    %211 = vmatprep.mubr.f32.mxu0 0.0
    %212 = vmatmul.mubr.f32.gmra.mrb[0].mxu0 %v60
    %v213 = vpop.f32.mrb[0].mxu0
    %v214 = vadd.f32 %v130, %v213
    %v215 = vpop.f32.mrb[0].mxu0
    %v216 = vadd.f32 %v134, %v215
    %217 = vdwg.mxu0
    %218 = vmatprep.subr.mxu0 %v64
    %219 = vmatpush1.msra.mxu0 %v63
    %220 = vmatprep.subr.mxu0 %v68
    %221 = vmatpush1.msra.mxu0 %v67
    %222 = vmatprep.subr.mxu0 %v72
    %223 = vmatpush1.msra.mxu0 %v71
    %224 = vmatprep.subr.mxu0 %v76
    %225 = vmatpush1.msra.mxu0 %v75
    %226 = vmatprep.subr.mxu0 %v80
    %227 = vmatpush1.msra.mxu0 %v79
    %228 = vmatprep.subr.mxu0 %v84
    %229 = vmatpush1.msra.mxu0 %v83
    %230 = vmatprep.subr.mxu0 %v88
    %231 = vmatpush1.msra.mxu0 %v87
    %232 = vmatprep.subr.mxu0 %v92
    %233 = vmatpush1.msra.mxu0 %v91
    %234 = vmatprep.subr.mxu0 %v96
    %235 = vmatpush1.msra.mxu0 %v95
    %236 = vmatprep.subr.mxu0 %v100
    %237 = vmatpush1.msra.mxu0 %v99
    %238 = vmatprep.subr.mxu0 %v104
    %239 = vmatpush1.msra.mxu0 %v103
    %240 = vmatprep.subr.mxu0 %v108
    %241 = vmatpush1.msra.mxu0 %v107
    %242 = vmatprep.subr.mxu0 %v112
    %243 = vmatpush1.msra.mxu0 %v111
    %244 = vmatprep.subr.mxu0 %v116
    %245 = vmatpush1.msra.mxu0 %v115
    %246 = vmatprep.subr.mxu0 %v120
    %247 = vmatpush1.msra.mxu0 %v119
    %248 = vmatprep.subr.mxu0 %v124
    %249 = vmatpush1.msra.mxu0 %v123
    %250 = vmatprep.subr.mxu0 0.0
    %251 = vmatpush1.msra.mxu0 0.0
    %252 = vmatprep.subr.mxu0 0.0
    %253 = vmatpush1.msra.mxu0 0.0
    %254 = vmatprep.subr.mxu0 0.0
    %255 = vmatpush1.msra.mxu0 0.0
    %256 = vmatprep.subr.mxu0 0.0
    %257 = vmatpush1.msra.mxu0 0.0
    %258 = vmatprep.subr.mxu0 0.0
    %259 = vmatpush1.msra.mxu0 0.0
    %260 = vmatprep.subr.mxu0 0.0
    %261 = vmatpush1.msra.mxu0 0.0
    %262 = vmatprep.subr.mxu0 0.0
    %263 = vmatpush1.msra.mxu0 0.0
    %264 = vmatprep.subr.mxu0 0.0
    %265 = vmatpush1.msra.mxu0 0.0
    %266 = vmatprep.subr.mxu0 0.0
    %267 = vmatpush1.msra.mxu0 0.0
    %268 = vmatprep.subr.mxu0 0.0
    %269 = vmatpush1.msra.mxu0 0.0
    %270 = vmatprep.subr.mxu0 0.0
    %271 = vmatpush1.msra.mxu0 0.0
    %272 = vmatprep.subr.mxu0 0.0
    %273 = vmatpush1.msra.mxu0 0.0
    %274 = vmatprep.subr.mxu0 0.0
    %275 = vmatpush1.msra.mxu0 0.0
    %276 = vmatprep.subr.mxu0 0.0
    %277 = vmatpush1.msra.mxu0 0.0
    %278 = vmatprep.subr.mxu0 0.0
    %279 = vmatpush1.msra.mxu0 0.0
    %280 = vmatprep.subr.mxu0 0.0
    %281 = vmatpush1.msra.mxu0 0.0
    %282 = vmatprep.mubr.f32.mxu0 0.0
    %283 = vmatmul.mubr.f32.gmra.mrb[0].mxu0 %v60
    %v284 = vpop.f32.mrb[0].mxu0
    %v285 = vadd.f32 %v138, %v284
    %v286 = vpop.f32.mrb[0].mxu0
    %v287 = vadd.f32 %v142, %v286
    %288 = vdwg.mxu0
    %v289 = vmul.f32 %v214, 0.5
    %v290 = vmul.f32 %v216, 0.5
    %v291 = vmul.f32 %v285, 0.5
    %v292 = vmul.f32 %v287, 0.5
    %v293 = vmul.f32 %v214, 0.70710677
    %v294 = vmul.f32 %v216, 0.70710677
    %v295 = vmul.f32 %v285, 0.70710677
    %v296 = vmul.f32 %v287, 0.70710677
    %v297 = verf.f32.pop %v293
    %v298 = verf.f32.pop %v294
    %v299 = verf.f32.pop %v295
    %v300 = verf.f32.pop %v296
    %v301 = vadd.f32 %v297, 1.0
    %v302 = vadd.f32 %v298, 1.0
    %v303 = vadd.f32 %v299, 1.0
    %v304 = vadd.f32 %v300, 1.0
    %v305 = vmul.f32 %v289, %v301
    %v306 = vmul.f32 %v290, %v302
    %v307 = vmul.f32 %v291, %v303
    %v308 = vmul.f32 %v292, %v304
    %v309 = vld [vmem:[#allocation7] sm:$0xff]
    %v310 = vld [vmem:[#allocation7 + $0x8] sm:$0xff]
    %v311 = vld [vmem:[#allocation7 + $0x10] sm:$0xff]
    %v312 = vld [vmem:[#allocation7 + $0x18] sm:$0xff]
    %v313 = vld [vmem:[#allocation7 + $0x20] sm:$0xff]
    %v314 = vld [vmem:[#allocation7 + $0x28] sm:$0xff]
    %v315 = vld [vmem:[#allocation7 + $0x30] sm:$0xff]
    %v316 = vld [vmem:[#allocation7 + $0x38] sm:$0xff]
    %v317 = vld [vmem:[#allocation7 + $0x40] sm:$0xff]
    %v318 = vld [vmem:[#allocation7 + $0x48] sm:$0xff]
    %v319 = vld [vmem:[#allocation7 + $0x50] sm:$0xff]
    %v320 = vld [vmem:[#allocation7 + $0x58] sm:$0xff]
    %v321 = vld [vmem:[#allocation7 + $0x60] sm:$0xff]
    %v322 = vld [vmem:[#allocation7 + $0x68] sm:$0xff]
    %v323 = vld [vmem:[#allocation7 + $0x70] sm:$0xff]
    %v324 = vld [vmem:[#allocation7 + $0x78] sm:$0xff]
    %v325 = vld [vmem:[#allocation7 + $0x80] sm:$0xff]
    %v326 = vld [vmem:[#allocation7 + $0x88] sm:$0xff]
    %v327 = vld [vmem:[#allocation7 + $0x90] sm:$0xff]
    %v328 = vld [vmem:[#allocation7 + $0x98] sm:$0xff]
    %v329 = vld [vmem:[#allocation7 + $0xa0] sm:$0xff]
    %v330 = vld [vmem:[#allocation7 + $0xa8] sm:$0xff]
    %v331 = vld [vmem:[#allocation7 + $0xb0] sm:$0xff]
    %v332 = vld [vmem:[#allocation7 + $0xb8] sm:$0xff]
    %v333 = vld [vmem:[#allocation7 + $0xc0] sm:$0xff]
    %v334 = vld [vmem:[#allocation7 + $0xc8] sm:$0xff]
    %v335 = vld [vmem:[#allocation7 + $0xd0] sm:$0xff]
    %v336 = vld [vmem:[#allocation7 + $0xd8] sm:$0xff]
    %v337 = vld [vmem:[#allocation7 + $0xe0] sm:$0xff]
    %v338 = vld [vmem:[#allocation7 + $0xe8] sm:$0xff]
    %v339 = vld [vmem:[#allocation7 + $0xf0] sm:$0xff]
    %v340 = vld [vmem:[#allocation7 + $0xf8] sm:$0xff]
    %v341 = vld [vmem:[#allocation7 + $0x100] sm:$0xff]
    %v342 = vld [vmem:[#allocation7 + $0x108] sm:$0xff]
    %v343 = vld [vmem:[#allocation7 + $0x110] sm:$0xff]
    %v344 = vld [vmem:[#allocation7 + $0x118] sm:$0xff]
    %v345 = vld [vmem:[#allocation7 + $0x120] sm:$0xff]
    %v346 = vld [vmem:[#allocation7 + $0x128] sm:$0xff]
    %v347 = vld [vmem:[#allocation7 + $0x130] sm:$0xff]
    %v348 = vld [vmem:[#allocation7 + $0x138] sm:$0xff]
    %v349 = vld [vmem:[#allocation7 + $0x140] sm:$0xff]
    %v350 = vld [vmem:[#allocation7 + $0x148] sm:$0xff]
    %v351 = vld [vmem:[#allocation7 + $0x150] sm:$0xff]
    %v352 = vld [vmem:[#allocation7 + $0x158] sm:$0xff]
    %v353 = vld [vmem:[#allocation7 + $0x160] sm:$0xff]
    %v354 = vld [vmem:[#allocation7 + $0x168] sm:$0xff]
    %v355 = vld [vmem:[#allocation7 + $0x170] sm:$0xff]
    %v356 = vld [vmem:[#allocation7 + $0x178] sm:$0xff]
    %v357 = vld [vmem:[#allocation7 + $0x180] sm:$0xff]
    %v358 = vld [vmem:[#allocation7 + $0x188] sm:$0xff]
    %v359 = vld [vmem:[#allocation7 + $0x190] sm:$0xff]
    %v360 = vld [vmem:[#allocation7 + $0x198] sm:$0xff]
    %v361 = vld [vmem:[#allocation7 + $0x1a0] sm:$0xff]
    %v362 = vld [vmem:[#allocation7 + $0x1a8] sm:$0xff]
    %v363 = vld [vmem:[#allocation7 + $0x1b0] sm:$0xff]
    %v364 = vld [vmem:[#allocation7 + $0x1b8] sm:$0xff]
    %v365 = vld [vmem:[#allocation7 + $0x1c0] sm:$0xff]
    %v366 = vld [vmem:[#allocation7 + $0x1c8] sm:$0xff]
    %v367 = vld [vmem:[#allocation7 + $0x1d0] sm:$0xff]
    %v368 = vld [vmem:[#allocation7 + $0x1d8] sm:$0xff]
    %v369 = vld [vmem:[#allocation7 + $0x1e0] sm:$0xff]
    %v370 = vld [vmem:[#allocation7 + $0x1e8] sm:$0xff]
    %v371 = vld [vmem:[#allocation7 + $0x1f0] sm:$0xff]
    %v372 = vld [vmem:[#allocation7 + $0x1f8] sm:$0xff]
    %v373 = vld [vmem:[%s4] sm:$0x1]
    %v375 = vlaneseq
    %v376 = vshrl.u32 %v375, 7
    %v377 = vsub.s32 0, %v376
    %v378 = vrot.slane %v373, %v377
    %380 = vmatprep.subr.mxu0 0.0
    %381 = vmatpush1.msra.mxu0 %v309
    %382 = vmatprep.subr.mxu0 0.0
    %383 = vmatpush1.msra.mxu0 %v310
    %384 = vmatprep.subr.mxu0 0.0
    %385 = vmatpush1.msra.mxu0 %v311
    %386 = vmatprep.subr.mxu0 0.0
    %387 = vmatpush1.msra.mxu0 %v312
    %388 = vmatprep.subr.mxu0 0.0
    %389 = vmatpush1.msra.mxu0 %v313
    %390 = vmatprep.subr.mxu0 0.0
    %391 = vmatpush1.msra.mxu0 %v314
    %392 = vmatprep.subr.mxu0 0.0
    %393 = vmatpush1.msra.mxu0 %v315
    %394 = vmatprep.subr.mxu0 0.0
    %395 = vmatpush1.msra.mxu0 %v316
    %396 = vmatprep.subr.mxu0 0.0
    %397 = vmatpush1.msra.mxu0 %v317
    %398 = vmatprep.subr.mxu0 0.0
    %399 = vmatpush1.msra.mxu0 %v318
    %400 = vmatprep.subr.mxu0 0.0
    %401 = vmatpush1.msra.mxu0 %v319
    %402 = vmatprep.subr.mxu0 0.0
    %403 = vmatpush1.msra.mxu0 %v320
    %404 = vmatprep.subr.mxu0 0.0
    %405 = vmatpush1.msra.mxu0 %v321
    %406 = vmatprep.subr.mxu0 0.0
    %407 = vmatpush1.msra.mxu0 %v322
    %408 = vmatprep.subr.mxu0 0.0
    %409 = vmatpush1.msra.mxu0 %v323
    %410 = vmatprep.subr.mxu0 0.0
    %411 = vmatpush1.msra.mxu0 %v324
    %412 = vmatprep.subr.mxu0 0.0
    %413 = vmatpush1.msra.mxu0 %v325
    %414 = vmatprep.subr.mxu0 0.0
    %415 = vmatpush1.msra.mxu0 %v326
    %416 = vmatprep.subr.mxu0 0.0
    %417 = vmatpush1.msra.mxu0 %v327
    %418 = vmatprep.subr.mxu0 0.0
    %419 = vmatpush1.msra.mxu0 %v328
    %420 = vmatprep.subr.mxu0 0.0
    %421 = vmatpush1.msra.mxu0 %v329
    %422 = vmatprep.subr.mxu0 0.0
    %423 = vmatpush1.msra.mxu0 %v330
    %424 = vmatprep.subr.mxu0 0.0
    %425 = vmatpush1.msra.mxu0 %v331
    %426 = vmatprep.subr.mxu0 0.0
    %427 = vmatpush1.msra.mxu0 %v332
    %428 = vmatprep.subr.mxu0 0.0
    %429 = vmatpush1.msra.mxu0 %v333
    %430 = vmatprep.subr.mxu0 0.0
    %431 = vmatpush1.msra.mxu0 %v334
    %432 = vmatprep.subr.mxu0 0.0
    %433 = vmatpush1.msra.mxu0 %v335
    %434 = vmatprep.subr.mxu0 0.0
    %435 = vmatpush1.msra.mxu0 %v336
    %436 = vmatprep.subr.mxu0 0.0
    %437 = vmatpush1.msra.mxu0 %v337
    %438 = vmatprep.subr.mxu0 0.0
    %439 = vmatpush1.msra.mxu0 %v338
    %440 = vmatprep.subr.mxu0 0.0
    %441 = vmatpush1.msra.mxu0 %v339
    %442 = vmatprep.subr.mxu0 0.0
    %443 = vmatpush1.msra.mxu0 %v340
    %444 = vmatprep.mubr.f32.mxu0 %v306
    %445 = vmatmul.mubr.f32.gmra.mrb[0].mxu0 %v305
    %v446 = vpop.f32.mrb[0].mxu0
    %v447 = vadd.f32 %v378, %v446
    %v448 = vpop.f32.mrb[0].mxu0
    %449 = vdwg.mxu0
    %450 = vmatprep.subr.mxu0 0.0
    %451 = vmatpush1.msra.mxu0 %v341
    %452 = vmatprep.subr.mxu0 0.0
    %453 = vmatpush1.msra.mxu0 %v342
    %454 = vmatprep.subr.mxu0 0.0
    %455 = vmatpush1.msra.mxu0 %v343
    %456 = vmatprep.subr.mxu0 0.0
    %457 = vmatpush1.msra.mxu0 %v344
    %458 = vmatprep.subr.mxu0 0.0
    %459 = vmatpush1.msra.mxu0 %v345
    %460 = vmatprep.subr.mxu0 0.0
    %461 = vmatpush1.msra.mxu0 %v346
    %462 = vmatprep.subr.mxu0 0.0
    %463 = vmatpush1.msra.mxu0 %v347
    %464 = vmatprep.subr.mxu0 0.0
    %465 = vmatpush1.msra.mxu0 %v348
    %466 = vmatprep.subr.mxu0 0.0
    %467 = vmatpush1.msra.mxu0 %v349
    %468 = vmatprep.subr.mxu0 0.0
    %469 = vmatpush1.msra.mxu0 %v350
    %470 = vmatprep.subr.mxu0 0.0
    %471 = vmatpush1.msra.mxu0 %v351
    %472 = vmatprep.subr.mxu0 0.0
    %473 = vmatpush1.msra.mxu0 %v352
    %474 = vmatprep.subr.mxu0 0.0
    %475 = vmatpush1.msra.mxu0 %v353
    %476 = vmatprep.subr.mxu0 0.0
    %477 = vmatpush1.msra.mxu0 %v354
    %478 = vmatprep.subr.mxu0 0.0
    %479 = vmatpush1.msra.mxu0 %v355
    %480 = vmatprep.subr.mxu0 0.0
    %481 = vmatpush1.msra.mxu0 %v356
    %482 = vmatprep.subr.mxu0 0.0
    %483 = vmatpush1.msra.mxu0 %v357
    %484 = vmatprep.subr.mxu0 0.0
    %485 = vmatpush1.msra.mxu0 %v358
    %486 = vmatprep.subr.mxu0 0.0
    %487 = vmatpush1.msra.mxu0 %v359
    %488 = vmatprep.subr.mxu0 0.0
    %489 = vmatpush1.msra.mxu0 %v360
    %490 = vmatprep.subr.mxu0 0.0
    %491 = vmatpush1.msra.mxu0 %v361
    %492 = vmatprep.subr.mxu0 0.0
    %493 = vmatpush1.msra.mxu0 %v362
    %494 = vmatprep.subr.mxu0 0.0
    %495 = vmatpush1.msra.mxu0 %v363
    %496 = vmatprep.subr.mxu0 0.0
    %497 = vmatpush1.msra.mxu0 %v364
    %498 = vmatprep.subr.mxu0 0.0
    %499 = vmatpush1.msra.mxu0 %v365
    %500 = vmatprep.subr.mxu0 0.0
    %501 = vmatpush1.msra.mxu0 %v366
    %502 = vmatprep.subr.mxu0 0.0
    %503 = vmatpush1.msra.mxu0 %v367
    %504 = vmatprep.subr.mxu0 0.0
    %505 = vmatpush1.msra.mxu0 %v368
    %506 = vmatprep.subr.mxu0 0.0
    %507 = vmatpush1.msra.mxu0 %v369
    %508 = vmatprep.subr.mxu0 0.0
    %509 = vmatpush1.msra.mxu0 %v370
    %510 = vmatprep.subr.mxu0 0.0
    %511 = vmatpush1.msra.mxu0 %v371
    %512 = vmatprep.subr.mxu0 0.0
    %513 = vmatpush1.msra.mxu0 %v372
    %514 = vmatprep.mubr.f32.mxu0 %v308
    %515 = vmatmul.mubr.f32.gmra.mrb[0].mxu0 %v307
    %v516 = vpop.f32.mrb[0].mxu0
    %v517 = vadd.f32 %v447, %v516
    %v518 = vpop.f32.mrb[0].mxu0
    %519 = vdwg.mxu0
    %520 = vst [vmem:[#allocation8] sm:$0xf] %v517
    // Predicated region
    $region34: #{tpu_custom_call.1} parent=1 // pred_check
      _
    $region35: #{tpu_custom_call.1} parent=1 // pred_check_branch
      %522 = sbr.rel (0) target = $region37
    $region36: #{tpu_custom_call.1} parent=1 // pred_region
      %s524 = ssub.s32 64, 64
      %525 = vsyncadd [#allocation4], %s524
      %s527 = sshll.u32 [#allocation8], 4
      %s528 = int_to_ptr.vmem [resolvable:$true] %s527
      %530 = dma.vmem_to_hbm [thread:$0]  %s528, 64, %s5, [#allocation4]
    $region37: #{tpu_custom_call.1} parent=1 // pred_fallthru
      _
    // Predicated region
    $region38: #{tpu_custom_call.1} parent=1 // pred_check
      _
    $region39: #{tpu_custom_call.1} parent=1 // pred_check_branch
      %532 = sbr.rel (0) target = $region41
    $region40: #{tpu_custom_call.1} parent=1 // pred_region
      %533 = dma.done [#allocation4], 64
    $region41: #{tpu_custom_call.1} parent=1 // pred_fallthru
      _
    %534 = vsyncpa [#allocation3], 1
    %535 = vsyncpa [#allocation6], 1
    %536 = vsyncpa [#allocation4], 1

</llo_original>
